<compile_context>
chip_gen: v7x
topology: tpu7x:2x2x1
jax: 0.10.0
libtpu: 0.0.40
codegen_flags: <defaults>
</compile_context>

<pallas_src>
import jax
import jax.numpy as jnp
from jax.experimental import pallas as pl
from jax.experimental.pallas import tpu as pltpu


def _round_up(n, m):
    return ((n + m - 1) // m) * m


def cvae_kernel(x_ref, c_ref, eps_ref, wex_ref, wec_ref, be_ref,
                wmv_ref, bmv_ref, logsm_ref, z_ref):
    x = x_ref[...]                       # (TB, X_dim) f32
    c = c_ref[...]                       # (TB, y_dim) f32

    # fcE(cat([x, c], 1)) == x @ We[:, :X_dim].T + c @ We[:, X_dim:].T + be
    out = (jnp.dot(x, wex_ref[...], preferred_element_type=jnp.float32)
           + jnp.dot(c, wec_ref[...], preferred_element_type=jnp.float32)
           + be_ref[...])                                   # (TB, h_dim)

    # Fused mu/var projection: one MXU matmul against (h_dim, 2*ZP);
    # mu in lanes [0, ZP), var in lanes [ZP, 2*ZP) -> clean 128-lane split.
    mv = (jnp.dot(out, wmv_ref[...], preferred_element_type=jnp.float32)
          + bmv_ref[...])                                   # (TB, 2*ZP)
    zp = z_ref.shape[-1]
    z_mu = mv[:, :zp]
    z_var = mv[:, zp:]

    # sample_z: mu + exp(log_var / 2) * eps   (padding lanes come out as 0)
    z_ref[...] = z_mu + jnp.exp(z_var * 0.5) * eps_ref[...]

    # F.log_softmax(x_flat, dim=1), numerically stable.
    m = jnp.max(x, axis=1, keepdims=True)
    lse = m + jnp.log(jnp.sum(jnp.exp(x - m), axis=1, keepdims=True))
    logsm_ref[...] = x - lse


def prepare_params(params, X_dim):
    """One-time param preprocessing (hoisted out of the per-call path)."""
    We, be, Wmu, bmu, Wvar, bvar = params
    h_dim = We.shape[0]
    Z_dim = Wmu.shape[0]
    ZP = _round_up(Z_dim, 128)

    wex = jnp.asarray(We[:, :X_dim].T, jnp.float32)          # (X_dim, h_dim)
    wec = jnp.asarray(We[:, X_dim:].T, jnp.float32)          # (y_dim, h_dim)
    be2 = jnp.asarray(be, jnp.float32).reshape(1, h_dim)

    # Fused, lane-padded [Wmu | Wvar] projection.
    wmv = jnp.zeros((h_dim, 2 * ZP), jnp.float32)
    wmv = wmv.at[:, :Z_dim].set(Wmu.T.astype(jnp.float32))
    wmv = wmv.at[:, ZP:ZP + Z_dim].set(Wvar.T.astype(jnp.float32))
    bmv = jnp.zeros((1, 2 * ZP), jnp.float32)
    bmv = bmv.at[0, :Z_dim].set(bmu.astype(jnp.float32))
    bmv = bmv.at[0, ZP:ZP + Z_dim].set(bvar.astype(jnp.float32))

    return {"wex": wex, "wec": wec, "be": be2, "wmv": wmv, "bmv": bmv,
            "Z_dim": Z_dim, "ZP": ZP}


def _pick_tb(B):
    for tb in (256, 128, 64, 32, 16, 8):
        if B % tb == 0:
            return tb
    return B


def cvae_forward(x, c, prepped, eps, *, tb=None):
    """x: (B, C, H, W) f32, c: (B, y_dim) f32, eps: (B, Z_dim) f32."""
    B = x.shape[0]
    x_flat = x.reshape(B, -1).astype(jnp.float32)            # torch .view(-1, nff)
    X_dim = x_flat.shape[1]
    y_dim = c.shape[1]
    Z_dim, ZP = prepped["Z_dim"], prepped["ZP"]

    c32 = c.astype(jnp.float32)
    eps_pad = jnp.pad(eps.astype(jnp.float32), ((0, 0), (0, ZP - Z_dim)))

    TB = tb if tb is not None else _pick_tb(B)
    assert B % TB == 0, "batch must be divisible by the batch tile"
    grid = (B // TB,)

    tiled = lambda i: (i, 0)      # batch-tiled operands
    resident = lambda i: (0, 0)   # weights/biases: same block every grid step

    wex, wec, be2 = prepped["wex"], prepped["wec"], prepped["be"]
    wmv, bmv = prepped["wmv"], prepped["bmv"]
    h_dim = wex.shape[1]

    log_probs, z_pad = pl.pallas_call(
        cvae_kernel,
        grid=grid,
        in_specs=[
            pl.BlockSpec((TB, X_dim), tiled),          # x_flat
            pl.BlockSpec((TB, y_dim), tiled),          # c (one-hot)
            pl.BlockSpec((TB, ZP), tiled),             # eps (lane-padded)
            pl.BlockSpec((X_dim, h_dim), resident),    # We[:, :X_dim].T
            pl.BlockSpec((y_dim, h_dim), resident),    # We[:, X_dim:].T
            pl.BlockSpec((1, h_dim), resident),        # be
            pl.BlockSpec((h_dim, 2 * ZP), resident),   # fused [Wmu|Wvar].T
            pl.BlockSpec((1, 2 * ZP), resident),       # fused [bmu|bvar]
        ],
        out_specs=[
            pl.BlockSpec((TB, X_dim), tiled),          # log_softmax(x_flat)
            pl.BlockSpec((TB, ZP), tiled),             # z (lane-dense, padded)
        ],
        out_shape=[jax.ShapeDtypeStruct((B, X_dim), jnp.float32),
                   jax.ShapeDtypeStruct((B, ZP), jnp.float32)],
        input_output_aliases={0: 0},   # reuse x_flat's HBM buffer for log_probs
        compiler_params=pltpu.CompilerParams(
            dimension_semantics=("parallel",)),
    )(x_flat, c32, eps_pad, wex, wec, be2, wmv, bmv)

    # The module's forward returns only F.log_softmax(x, dim=1); z is the
    # (otherwise unused) reparameterized latent computed along the way.
    return log_probs, z_pad[:, :Z_dim]


def init_params(key, X_dim, y_dim, h_dim, Z_dim):
    """Deterministic nn.Linear-style init: U(-1/sqrt(fan_in), 1/sqrt(fan_in))."""
    def linear(k, fan_in, fan_out):
        kw, kb = jax.random.split(k)
        bound = 1.0 / jnp.sqrt(fan_in)
        W = jax.random.uniform(kw, (fan_out, fan_in), jnp.float32, -bound, bound)
        b = jax.random.uniform(kb, (fan_out,), jnp.float32, -bound, bound)
        return W, b

    k1, k2, k3 = jax.random.split(key, 3)
    We, be = linear(k1, X_dim + y_dim, h_dim)      # fcE
    Wmu, bmu = linear(k2, h_dim, Z_dim)            # fcE_mu
    Wvar, bvar = linear(k3, h_dim, Z_dim)          # fcE_var
    # TODO(synk): fcD1 / fcD2 / relu / sigmoid are defined in __init__ but
    # never used in forward, so they are not instantiated here.
    return We, be, Wmu, bmu, Wvar, bvar


if __name__ == "__main__":
    # Small, forward-consistent shapes (multiple grid steps: B=16, TB=8).
    B, C, H, W = 16, 1, 8, 8          # x: (B, C, H, W) -> X_dim = 64
    y_dim, h_dim, Z_dim = 10, 32, 16

    key = jax.random.PRNGKey(0)
    kx, kc, keps, kp = jax.random.split(key, 4)

    x = jax.random.normal(kx, (B, C, H, W), jnp.float32)
    labels = jax.random.randint(kc, (B,), 0, y_dim)
    c = jax.nn.one_hot(labels, y_dim, dtype=jnp.float32)     # to_one_hot
    eps = jax.random.normal(keps, (B, Z_dim), jnp.float32)   # torch.randn eps

    params = init_params(kp, C * H * W, y_dim, h_dim, Z_dim)
    prepped = prepare_params(params, C * H * W)              # one-time prep

    log_probs, z = cvae_forward(x, c, prepped, eps, tb=8)
    jax.block_until_ready((log_probs, z))

    # Sanity check against pure-JAX reference.
    x_flat = x.reshape(B, -1)
    ref_logp = jax.nn.log_softmax(x_flat, axis=1)
    We, be, Wmu, bmu, Wvar, bvar = params
    inputs = jnp.concatenate([x_flat, c], axis=1)
    out = inputs @ We.T + be
    z_mu = out @ Wmu.T + bmu
    z_var = out @ Wvar.T + bvar
    ref_z = z_mu + jnp.exp(z_var / 2.0) * eps
    assert jnp.allclose(log_probs, ref_logp, atol=1e-5, rtol=1e-5)
    assert jnp.allclose(z, ref_z, atol=1e-5, rtol=1e-5)

    print("KERNEL_OK")
</pallas_src>

<mosaic_0001>
module attributes {stable_mosaic.version = 11 : i64} {
  func.func @cvae_kernel(%arg0: i32, %arg1: memref<8x64xf32, #tpu.memory_space<vmem>>, %arg2: memref<8x10xf32, #tpu.memory_space<vmem>>, %arg3: memref<8x128xf32, #tpu.memory_space<vmem>>, %arg4: memref<64x32xf32, #tpu.memory_space<vmem>>, %arg5: memref<10x32xf32, #tpu.memory_space<vmem>>, %arg6: memref<1x32xf32, #tpu.memory_space<vmem>>, %arg7: memref<32x256xf32, #tpu.memory_space<vmem>>, %arg8: memref<1x256xf32, #tpu.memory_space<vmem>>, %arg9: memref<8x64xf32, #tpu.memory_space<vmem>>, %arg10: memref<8x128xf32, #tpu.memory_space<vmem>>) attributes {dimension_semantics = [#tpu.dimension_semantics<parallel>], iteration_bounds = array<i64: 2>, scalar_prefetch = 0 : i64, scratch_operands = 0 : i64, tpu.core_type = #tpu.core_type<tc>, window_params = [{transform_indices = @transform_0, window_bounds = array<i64: 8, 64>}, {transform_indices = @transform_1, window_bounds = array<i64: 8, 10>}, {transform_indices = @transform_2, window_bounds = array<i64: 8, 128>}, {pipeline_mode = #tpu.pipeline_mode<synchronous>, transform_indices = @transform_3, window_bounds = array<i64: 64, 32>}, {pipeline_mode = #tpu.pipeline_mode<synchronous>, transform_indices = @transform_4, window_bounds = array<i64: 10, 32>}, {pipeline_mode = #tpu.pipeline_mode<synchronous>, transform_indices = @transform_5, window_bounds = array<i64: 1, 32>}, {pipeline_mode = #tpu.pipeline_mode<synchronous>, transform_indices = @transform_6, window_bounds = array<i64: 32, 256>}, {pipeline_mode = #tpu.pipeline_mode<synchronous>, transform_indices = @transform_7, window_bounds = array<i64: 1, 256>}, {transform_indices = @transform_8, window_bounds = array<i64: 8, 64>}, {transform_indices = @transform_9, window_bounds = array<i64: 8, 128>}]} {
    %c0 = arith.constant 0 : index
    %c0_0 = arith.constant 0 : index
    %0 = vector.load %arg1[%c0, %c0_0] : memref<8x64xf32, #tpu.memory_space<vmem>>, vector<8x64xf32>
    %c0_1 = arith.constant 0 : index
    %c0_2 = arith.constant 0 : index
    %1 = vector.load %arg2[%c0_1, %c0_2] : memref<8x10xf32, #tpu.memory_space<vmem>>, vector<8x10xf32>
    %c0_3 = arith.constant 0 : index
    %c0_4 = arith.constant 0 : index
    %2 = vector.load %arg4[%c0_3, %c0_4] : memref<64x32xf32, #tpu.memory_space<vmem>>, vector<64x32xf32>
    %cst = arith.constant dense<0.000000e+00> : vector<8x32xf32>
    %3 = tpu.matmul %0, %2, %cst {dimension_numbers = #tpu.dot_dimension_numbers<[1], [0], [0], [1], [0, 0, 1, 1], [], []>} : vector<8x64xf32>, vector<64x32xf32>, vector<8x32xf32> -> vector<8x32xf32>
    %c0_5 = arith.constant 0 : index
    %c0_6 = arith.constant 0 : index
    %4 = vector.load %arg5[%c0_5, %c0_6] : memref<10x32xf32, #tpu.memory_space<vmem>>, vector<10x32xf32>
    %cst_7 = arith.constant dense<0.000000e+00> : vector<8x32xf32>
    %5 = tpu.matmul %1, %4, %cst_7 {dimension_numbers = #tpu.dot_dimension_numbers<[1], [0], [0], [1], [0, 0, 1, 1], [], []>} : vector<8x10xf32>, vector<10x32xf32>, vector<8x32xf32> -> vector<8x32xf32>
    %6 = arith.addf %3, %5 : vector<8x32xf32>
    %c0_8 = arith.constant 0 : index
    %c0_9 = arith.constant 0 : index
    %7 = vector.load %arg6[%c0_8, %c0_9] : memref<1x32xf32, #tpu.memory_space<vmem>>, vector<1x32xf32>
    %8 = vector.broadcast %7 : vector<1x32xf32> to vector<8x32xf32>
    %9 = arith.addf %6, %8 : vector<8x32xf32>
    %c0_10 = arith.constant 0 : index
    %c0_11 = arith.constant 0 : index
    %10 = vector.load %arg7[%c0_10, %c0_11] : memref<32x256xf32, #tpu.memory_space<vmem>>, vector<32x256xf32>
    %cst_12 = arith.constant dense<0.000000e+00> : vector<8x256xf32>
    %11 = tpu.matmul %9, %10, %cst_12 {dimension_numbers = #tpu.dot_dimension_numbers<[1], [0], [0], [1], [0, 0, 1, 1], [], []>} : vector<8x32xf32>, vector<32x256xf32>, vector<8x256xf32> -> vector<8x256xf32>
    %c0_13 = arith.constant 0 : index
    %c0_14 = arith.constant 0 : index
    %12 = vector.load %arg8[%c0_13, %c0_14] : memref<1x256xf32, #tpu.memory_space<vmem>>, vector<1x256xf32>
    %13 = vector.broadcast %12 : vector<1x256xf32> to vector<8x256xf32>
    %14 = arith.addf %11, %13 : vector<8x256xf32>
    %15 = vector.extract_strided_slice %14 {offsets = [0, 0], sizes = [8, 128], strides = [1, 1]} : vector<8x256xf32> to vector<8x128xf32>
    %16 = vector.extract_strided_slice %14 {offsets = [0, 128], sizes = [8, 128], strides = [1, 1]} : vector<8x256xf32> to vector<8x128xf32>
    %cst_15 = arith.constant 5.000000e-01 : f32
    %17 = vector.broadcast %cst_15 : f32 to vector<8x128xf32>
    %18 = arith.mulf %16, %17 : vector<8x128xf32>
    %19 = math.exp %18 : vector<8x128xf32>
    %c0_16 = arith.constant 0 : index
    %c0_17 = arith.constant 0 : index
    %20 = vector.load %arg3[%c0_16, %c0_17] : memref<8x128xf32, #tpu.memory_space<vmem>>, vector<8x128xf32>
    %21 = arith.mulf %19, %20 : vector<8x128xf32>
    %22 = arith.addf %15, %21 : vector<8x128xf32>
    %c0_18 = arith.constant 0 : index
    %c0_19 = arith.constant 0 : index
    %23 = vector.load %arg10[%c0_18, %c0_19] : memref<8x128xf32, #tpu.memory_space<vmem>>, vector<8x128xf32>
    tpu.vector_store %arg10[%c0_18, %c0_19], %22 {strides = array<i32>} : memref<8x128xf32, #tpu.memory_space<vmem>>, vector<8x128xf32>,
    %cst_20 = arith.constant dense<0xFF800000> : vector<8xf32>
    %24 = vector.multi_reduction <maximumf>, %0, %cst_20 [1] : vector<8x64xf32> to vector<8xf32>
    %25 = vector.shape_cast %24 : vector<8xf32> to vector<8x1xf32>
    %26 = vector.broadcast %25 : vector<8x1xf32> to vector<8x64xf32>
    %27 = arith.subf %0, %26 : vector<8x64xf32>
    %28 = math.exp %27 : vector<8x64xf32>
    %cst_21 = arith.constant dense<0.000000e+00> : vector<8xf32>
    %29 = vector.multi_reduction <add>, %28, %cst_21 [1] : vector<8x64xf32> to vector<8xf32>
    %30 = vector.shape_cast %29 : vector<8xf32> to vector<8x1xf32>
    %31 = math.log %30 : vector<8x1xf32>
    %32 = arith.addf %25, %31 : vector<8x1xf32>
    %33 = vector.broadcast %32 : vector<8x1xf32> to vector<8x64xf32>
    %34 = arith.subf %0, %33 : vector<8x64xf32>
    %c0_22 = arith.constant 0 : index
    %c0_23 = arith.constant 0 : index
    %35 = vector.load %arg9[%c0_22, %c0_23] : memref<8x64xf32, #tpu.memory_space<vmem>>, vector<8x64xf32>
    tpu.vector_store %arg9[%c0_22, %c0_23], %34 {strides = array<i32>} : memref<8x64xf32, #tpu.memory_space<vmem>>, vector<8x64xf32>,
    return
  }
  func.func @transform_0(%arg0: i32) -> (i32, i32) {
    %c0_i32 = arith.constant 0 : i32
    %c0_i32_0 = arith.constant 0 : i32
    return %arg0, %c0_i32 : i32, i32
  }
  func.func @transform_1(%arg0: i32) -> (i32, i32) {
    %c0_i32 = arith.constant 0 : i32
    %c0_i32_0 = arith.constant 0 : i32
    return %arg0, %c0_i32 : i32, i32
  }
  func.func @transform_2(%arg0: i32) -> (i32, i32) {
    %c0_i32 = arith.constant 0 : i32
    %c0_i32_0 = arith.constant 0 : i32
    return %arg0, %c0_i32 : i32, i32
  }
  func.func @transform_3(%arg0: i32) -> (i32, i32) {
    %c0_i32 = arith.constant 0 : i32
    %c0_i32_0 = arith.constant 0 : i32
    %c0_i32_1 = arith.constant 0 : i32
    return %c0_i32, %c0_i32_0 : i32, i32
  }
  func.func @transform_4(%arg0: i32) -> (i32, i32) {
    %c0_i32 = arith.constant 0 : i32
    %c0_i32_0 = arith.constant 0 : i32
    %c0_i32_1 = arith.constant 0 : i32
    return %c0_i32, %c0_i32_0 : i32, i32
  }
  func.func @transform_5(%arg0: i32) -> (i32, i32) {
    %c0_i32 = arith.constant 0 : i32
    %c0_i32_0 = arith.constant 0 : i32
    %c0_i32_1 = arith.constant 0 : i32
    return %c0_i32, %c0_i32_0 : i32, i32
  }
  func.func @transform_6(%arg0: i32) -> (i32, i32) {
    %c0_i32 = arith.constant 0 : i32
    %c0_i32_0 = arith.constant 0 : i32
    %c0_i32_1 = arith.constant 0 : i32
    return %c0_i32, %c0_i32_0 : i32, i32
  }
  func.func @transform_7(%arg0: i32) -> (i32, i32) {
    %c0_i32 = arith.constant 0 : i32
    %c0_i32_0 = arith.constant 0 : i32
    %c0_i32_1 = arith.constant 0 : i32
    return %c0_i32, %c0_i32_0 : i32, i32
  }
  func.func @transform_8(%arg0: i32) -> (i32, i32) {
    %c0_i32 = arith.constant 0 : i32
    %c0_i32_0 = arith.constant 0 : i32
    return %arg0, %c0_i32 : i32, i32
  }
  func.func @transform_9(%arg0: i32) -> (i32, i32) {
    %c0_i32 = arith.constant 0 : i32
    %c0_i32_0 = arith.constant 0 : i32
    return %arg0, %c0_i32 : i32, i32
  }
}

</mosaic_0001>

<llo_original>
// kernel: tpu_custom_call.1
$region0: #{tpu_custom_call.1}
  #allocation0 [shape = 'u32[]', space=smem, size = 0x4, offset = 0x4, fixed_abs, tag = 'smem constant byte address 0x4 - core index']
  #allocation1 [shape = 'u32[144,128]{1,0:T(1,128)}', space=vmem, size = 0x12000, scoped, tag = 'internal scratch']
  %s0 = inlined_call_operand.hbm [shape: f32[16,64], index: 0, kind: input, shape index: {}, may-alias: {0,8}]
  %s1 = inlined_call_operand.vmem [shape: f32[16,10], index: 1, kind: input, shape index: {}]
  %s2 = inlined_call_operand.vmem [shape: f32[16,128], index: 2, kind: input, shape index: {}]
  %s3 = inlined_call_operand.vmem [shape: f32[64,32], index: 3, kind: input, shape index: {}]
  %s4 = inlined_call_operand.hbm [shape: f32[10,32], index: 4, kind: input, shape index: {}]
  %s5 = inlined_call_operand.vmem [shape: f32[1,32], index: 5, kind: input, shape index: {}]
  %s6 = inlined_call_operand.vmem [shape: f32[32,256], index: 6, kind: input, shape index: {}]
  %s7 = inlined_call_operand.vmem [shape: f32[1,256], index: 7, kind: input, shape index: {}]
  %s8 = inlined_call_operand.hbm [shape: f32[16,64], index: 8, kind: output, shape index: {0}, may-alias: {0,8}]
  %s9 = inlined_call_operand.hbm [shape: f32[16,128], index: 9, kind: output, shape index: {1}]
  %10 = xla_tuple %s8, %s9
  %s11 = sld [smem:[#allocation0]]
  $region81: #{tpu_custom_call.1} parent=0
    _
  %s13 = ssub.s32 1, %s11
  %s14 = scalar_select 0, %s13, %s11
  $region1: #{tpu_custom_call.1} parent=0
    #allocation2 [shape = 'u8[8192]{0}', space=vmem, size = 0x2000, scoped, tag = 'input window, operand 0']
    #allocation3 [shape = 's32[2]{0}', space=sflag, size = 0x8, scoped, tag = 'scoped memory for tpu_custom_call.1']
    #allocation4 [shape = 's32[2]{0}', space=sflag, size = 0x8, scoped, tag = 'scoped memory for tpu_custom_call.1']
    #allocation5 [shape = 'u8[8192]{0}', space=vmem, size = 0x2000, scoped, tag = 'input window, operand 4, single buffered']
    #allocation6 [shape = 's32[1]{0}', space=sflag, size = 0x4, scoped, tag = 'scoped memory for tpu_custom_call.1']
    #allocation7 [shape = 'u8[8192]{0}', space=vmem, size = 0x2000, scoped, tag = 'output window, operand 0']
    #allocation8 [shape = 'u8[8192]{0}', space=vmem, size = 0x2000, scoped, tag = 'output window, operand 1']
    #allocation9 [shape = 's32[2]{0}', space=sflag, size = 0x8, scoped, tag = 'scoped memory for tpu_custom_call.1']
    %15 = vsyncpa [#allocation3], 0
    %s16 = scalar_lea.sflag [#allocation3], 1
    %17 = vsyncpa %s16, 0
    %18 = vsyncpa [#allocation6], 0
    %19 = vsyncpa [#allocation4], 0
    %s20 = scalar_lea.sflag [#allocation4], 1
    %21 = vsyncpa %s20, 0
    %22 = vsyncpa [#allocation9], 0
    %s23 = scalar_lea.sflag [#allocation9], 1
    %24 = vsyncpa %s23, 0
    loop: start=0, step=1, limit=4
    $region2: #{tpu_custom_call.1} parent=1 // loop_pre_header
      _
    $region3: #{tpu_custom_call.1} parent=1 // loop_header
      %s26 = sphi 0, %s30
      %p27 = scmp.ge.s32.totalorder %s26, 4
      %s36 = sphi 0, %s38
      %s39 = sphi 0, %s36
      %s40 = sphi 0, %s39
      %s56 = sphi 0, %s40
      %s62 = sphi 0, %s64
      %s65 = sphi 0, %s62
      %s66 = sphi 0, %s65
      %s82 = sphi 0, %s66
      %s88 = sphi 0, %s90
      %s91 = sphi 0, %s88
      %s92 = sphi 0, %s91
      %s108 = sphi 0, %s92
      %s112 = sphi 0, %s112
      %s114 = sphi 0, %s112
      %s115 = sphi 0, %s114
      %s129 = sphi 0, %s115
      %s133 = sphi 0, %s133
      %s135 = sphi 0, %s133
      %s136 = sphi 0, %s135
      %s150 = sphi 0, %s136
      %s154 = sphi 0, %s154
      %s156 = sphi 0, %s154
      %s157 = sphi 0, %s156
      %s171 = sphi 0, %s157
      %s175 = sphi 0, %s175
      %s177 = sphi 0, %s175
      %s178 = sphi 0, %s177
      %s192 = sphi 0, %s178
      %s196 = sphi 0, %s196
      %s198 = sphi 0, %s196
      %s199 = sphi 0, %s198
      %s213 = sphi 0, %s199
      %s219 = sphi 0, %s221
      %s222 = sphi 0, %s219
      %s223 = sphi 0, %s222
      %s239 = sphi 0, %s223
      %s245 = sphi 0, %s247
      %s248 = sphi 0, %s245
      %s249 = sphi 0, %s248
      %s265 = sphi 0, %s249
    $region4: #{tpu_custom_call.1} parent=1 // loop_header_branch
      %29 = sbr.rel (%p27) target = $region8
    $region5: #{tpu_custom_call.1} parent=1 // loop_body
      %s31 = ssub.s32 %s26, 1
      %s32 = ssub.s32 %s26, 2
      %s33 = sadd.s32 %s26, 1
      %s34 = ssub.s32 %s26, %s33
      %p35 = scmp.eq.s32.totalorder %s34, 0
      %s37 = sadd.s32 %s36, 1
      %s38 = scalar_select %p35, %s36, %s37
      %p41 = pneg %p35
      %p42 = scmp.eq.s32.totalorder %s26, 1
      %p43 = por %p41, %p42
      %p44 = scmp.ne.s32.totalorder %s36, %s39
      %p45 = scmp.eq.s32.totalorder %s26, 0
      %p46 = por %p44, %p45
      %p47 = scmp.ne.s32.totalorder %s36, %s39
      %p48 = scmp.eq.s32.totalorder %s31, 1
      %p49 = por %p47, %p48
      %p50 = scmp.ne.s32.totalorder %s39, %s40
      %p51 = scmp.eq.s32.totalorder %s31, 0
      %p52 = por %p50, %p51
      %p53 = scmp.ne.s32.totalorder %s39, %s40
      %p54 = scmp.eq.s32.totalorder %s32, 1
      %p55 = por %p53, %p54
      %p57 = scmp.ne.s32.totalorder %s40, %s56
      %p58 = scmp.eq.s32.totalorder %s32, 0
      %p59 = por %p57, %p58
      %s60 = ssub.s32 %s26, %s33
      %p61 = scmp.eq.s32.totalorder %s60, 0
      %s63 = sadd.s32 %s62, 1
      %s64 = scalar_select %p61, %s62, %s63
      %p67 = pneg %p61
      %p68 = scmp.eq.s32.totalorder %s26, 1
      %p69 = por %p67, %p68
      %p70 = scmp.ne.s32.totalorder %s62, %s65
      %p71 = scmp.eq.s32.totalorder %s26, 0
      %p72 = por %p70, %p71
      %p73 = scmp.ne.s32.totalorder %s62, %s65
      %p74 = scmp.eq.s32.totalorder %s31, 1
      %p75 = por %p73, %p74
      %p76 = scmp.ne.s32.totalorder %s65, %s66
      %p77 = scmp.eq.s32.totalorder %s31, 0
      %p78 = por %p76, %p77
      %p79 = scmp.ne.s32.totalorder %s65, %s66
      %p80 = scmp.eq.s32.totalorder %s32, 1
      %p81 = por %p79, %p80
      %p83 = scmp.ne.s32.totalorder %s66, %s82
      %p84 = scmp.eq.s32.totalorder %s32, 0
      %p85 = por %p83, %p84
      %s86 = ssub.s32 %s26, %s33
      %p87 = scmp.eq.s32.totalorder %s86, 0
      %s89 = sadd.s32 %s88, 1
      %s90 = scalar_select %p87, %s88, %s89
      %p93 = pneg %p87
      %p94 = scmp.eq.s32.totalorder %s26, 1
      %p95 = por %p93, %p94
      %p96 = scmp.ne.s32.totalorder %s88, %s91
      %p97 = scmp.eq.s32.totalorder %s26, 0
      %p98 = por %p96, %p97
      %p99 = scmp.ne.s32.totalorder %s88, %s91
      %p100 = scmp.eq.s32.totalorder %s31, 1
      %p101 = por %p99, %p100
      %p102 = scmp.ne.s32.totalorder %s91, %s92
      %p103 = scmp.eq.s32.totalorder %s31, 0
      %p104 = por %p102, %p103
      %p105 = scmp.ne.s32.totalorder %s91, %s92
      %p106 = scmp.eq.s32.totalorder %s32, 1
      %p107 = por %p105, %p106
      %p109 = scmp.ne.s32.totalorder %s92, %s108
      %p110 = scmp.eq.s32.totalorder %s32, 0
      %p111 = por %p109, %p110
      %s113 = sadd.s32 %s112, 1
      %p116 = scmp.eq.s32.totalorder %s26, 1
      %p117 = scmp.ne.s32.totalorder %s112, %s114
      %p118 = scmp.eq.s32.totalorder %s26, 0
      %p119 = por %p117, %p118
      %p120 = scmp.ne.s32.totalorder %s112, %s114
      %p121 = scmp.eq.s32.totalorder %s31, 1
      %p122 = por %p120, %p121
      %p123 = scmp.ne.s32.totalorder %s114, %s115
      %p124 = scmp.eq.s32.totalorder %s31, 0
      %p125 = por %p123, %p124
      %p126 = scmp.ne.s32.totalorder %s114, %s115
      %p127 = scmp.eq.s32.totalorder %s32, 1
      %p128 = por %p126, %p127
      %p130 = scmp.ne.s32.totalorder %s115, %s129
      %p131 = scmp.eq.s32.totalorder %s32, 0
      %p132 = por %p130, %p131
      %s134 = sadd.s32 %s133, 1
      %p137 = scmp.eq.s32.totalorder %s26, 1
      %p138 = scmp.ne.s32.totalorder %s133, %s135
      %p139 = scmp.eq.s32.totalorder %s26, 0
      %p140 = por %p138, %p139
      %p141 = scmp.ne.s32.totalorder %s133, %s135
      %p142 = scmp.eq.s32.totalorder %s31, 1
      %p143 = por %p141, %p142
      %p144 = scmp.ne.s32.totalorder %s135, %s136
      %p145 = scmp.eq.s32.totalorder %s31, 0
      %p146 = por %p144, %p145
      %p147 = scmp.ne.s32.totalorder %s135, %s136
      %p148 = scmp.eq.s32.totalorder %s32, 1
      %p149 = por %p147, %p148
      %p151 = scmp.ne.s32.totalorder %s136, %s150
      %p152 = scmp.eq.s32.totalorder %s32, 0
      %p153 = por %p151, %p152
      %s155 = sadd.s32 %s154, 1
      %p158 = scmp.eq.s32.totalorder %s26, 1
      %p159 = scmp.ne.s32.totalorder %s154, %s156
      %p160 = scmp.eq.s32.totalorder %s26, 0
      %p161 = por %p159, %p160
      %p162 = scmp.ne.s32.totalorder %s154, %s156
      %p163 = scmp.eq.s32.totalorder %s31, 1
      %p164 = por %p162, %p163
      %p165 = scmp.ne.s32.totalorder %s156, %s157
      %p166 = scmp.eq.s32.totalorder %s31, 0
      %p167 = por %p165, %p166
      %p168 = scmp.ne.s32.totalorder %s156, %s157
      %p169 = scmp.eq.s32.totalorder %s32, 1
      %p170 = por %p168, %p169
      %p172 = scmp.ne.s32.totalorder %s157, %s171
      %p173 = scmp.eq.s32.totalorder %s32, 0
      %p174 = por %p172, %p173
      %s176 = sadd.s32 %s175, 1
      %p179 = scmp.eq.s32.totalorder %s26, 1
      %p180 = scmp.ne.s32.totalorder %s175, %s177
      %p181 = scmp.eq.s32.totalorder %s26, 0
      %p182 = por %p180, %p181
      %p183 = scmp.ne.s32.totalorder %s175, %s177
      %p184 = scmp.eq.s32.totalorder %s31, 1
      %p185 = por %p183, %p184
      %p186 = scmp.ne.s32.totalorder %s177, %s178
      %p187 = scmp.eq.s32.totalorder %s31, 0
      %p188 = por %p186, %p187
      %p189 = scmp.ne.s32.totalorder %s177, %s178
      %p190 = scmp.eq.s32.totalorder %s32, 1
      %p191 = por %p189, %p190
      %p193 = scmp.ne.s32.totalorder %s178, %s192
      %p194 = scmp.eq.s32.totalorder %s32, 0
      %p195 = por %p193, %p194
      %s197 = sadd.s32 %s196, 1
      %p200 = scmp.eq.s32.totalorder %s26, 1
      %p201 = scmp.ne.s32.totalorder %s196, %s198
      %p202 = scmp.eq.s32.totalorder %s26, 0
      %p203 = por %p201, %p202
      %p204 = scmp.ne.s32.totalorder %s196, %s198
      %p205 = scmp.eq.s32.totalorder %s31, 1
      %p206 = por %p204, %p205
      %p207 = scmp.ne.s32.totalorder %s198, %s199
      %p208 = scmp.eq.s32.totalorder %s31, 0
      %p209 = por %p207, %p208
      %p210 = scmp.ne.s32.totalorder %s198, %s199
      %p211 = scmp.eq.s32.totalorder %s32, 1
      %p212 = por %p210, %p211
      %p214 = scmp.ne.s32.totalorder %s199, %s213
      %p215 = scmp.eq.s32.totalorder %s32, 0
      %p216 = por %p214, %p215
      %s217 = ssub.s32 %s26, %s33
      %p218 = scmp.eq.s32.totalorder %s217, 0
      %s220 = sadd.s32 %s219, 1
      %s221 = scalar_select %p218, %s219, %s220
      %p224 = pneg %p218
      %p225 = scmp.eq.s32.totalorder %s26, 1
      %p226 = por %p224, %p225
      %p227 = scmp.ne.s32.totalorder %s219, %s222
      %p228 = scmp.eq.s32.totalorder %s26, 0
      %p229 = por %p227, %p228
      %p230 = scmp.ne.s32.totalorder %s219, %s222
      %p231 = scmp.eq.s32.totalorder %s31, 1
      %p232 = por %p230, %p231
      %p233 = scmp.ne.s32.totalorder %s222, %s223
      %p234 = scmp.eq.s32.totalorder %s31, 0
      %p235 = por %p233, %p234
      %p236 = scmp.ne.s32.totalorder %s222, %s223
      %p237 = scmp.eq.s32.totalorder %s32, 1
      %p238 = por %p236, %p237
      %p240 = scmp.ne.s32.totalorder %s223, %s239
      %p241 = scmp.eq.s32.totalorder %s32, 0
      %p242 = por %p240, %p241
      %s243 = ssub.s32 %s26, %s33
      %p244 = scmp.eq.s32.totalorder %s243, 0
      %s246 = sadd.s32 %s245, 1
      %s247 = scalar_select %p244, %s245, %s246
      %p250 = pneg %p244
      %p251 = scmp.eq.s32.totalorder %s26, 1
      %p252 = por %p250, %p251
      %p253 = scmp.ne.s32.totalorder %s245, %s248
      %p254 = scmp.eq.s32.totalorder %s26, 0
      %p255 = por %p253, %p254
      %p256 = scmp.ne.s32.totalorder %s245, %s248
      %p257 = scmp.eq.s32.totalorder %s31, 1
      %p258 = por %p256, %p257
      %p259 = scmp.ne.s32.totalorder %s248, %s249
      %p260 = scmp.eq.s32.totalorder %s31, 0
      %p261 = por %p259, %p260
      %p262 = scmp.ne.s32.totalorder %s248, %s249
      %p263 = scmp.eq.s32.totalorder %s32, 1
      %p264 = por %p262, %p263
      %p266 = scmp.ne.s32.totalorder %s249, %s265
      %p267 = scmp.eq.s32.totalorder %s32, 0
      %p268 = por %p266, %p267
      %p269 = scmp.le.s32.totalorder 1, %s26
      %p270 = scmp.lt.s32.totalorder %s26, 3
      %p271 = pnand %p269, %p270
      %p272 = pneg %p271
      // Predicated region
      $region9: #{tpu_custom_call.1} parent=5 // pred_check
        _
      $region10: #{tpu_custom_call.1} parent=5 // pred_check_branch
        %274 = sbr.rel (%p271) target = $region12
      $region11: #{tpu_custom_call.1} parent=5 // pred_region
        %s275 = ssub.s32 %s26, 1
        // Predicated region
        $region13: #{tpu_custom_call.1} parent=11 // pred_check
          %p276 = pneg %p125
        $region14: #{tpu_custom_call.1} parent=11 // pred_check_branch
          %278 = sbr.rel (%p276) target = $region16
        $region15: #{tpu_custom_call.1} parent=11 // pred_region
          _
        $region16: #{tpu_custom_call.1} parent=11 // pred_fallthru
          _
        // Predicated region
        $region17: #{tpu_custom_call.1} parent=11 // pred_check
          %p279 = pneg %p146
        $region18: #{tpu_custom_call.1} parent=11 // pred_check_branch
          %281 = sbr.rel (%p279) target = $region20
        $region19: #{tpu_custom_call.1} parent=11 // pred_region
          %s283 = ssub.s32 256, 256
          %284 = vsyncadd [#allocation6], %s283
          %s285 = sshll.u32 [#allocation5], 4
          %s286 = int_to_ptr.vmem [resolvable:$true] %s285
          %291 = dma.hbm_to_vmem [thread:$0]  %s4, 256, %s286, [#allocation6], 128, 128, 8
        $region20: #{tpu_custom_call.1} parent=11 // pred_fallthru
          _
        // Predicated region
        $region21: #{tpu_custom_call.1} parent=11 // pred_check
          %p292 = pneg %p167
        $region22: #{tpu_custom_call.1} parent=11 // pred_check_branch
          %294 = sbr.rel (%p292) target = $region24
        $region23: #{tpu_custom_call.1} parent=11 // pred_region
          _
        $region24: #{tpu_custom_call.1} parent=11 // pred_fallthru
          _
        // Predicated region
        $region25: #{tpu_custom_call.1} parent=11 // pred_check
          %p295 = pneg %p188
        $region26: #{tpu_custom_call.1} parent=11 // pred_check_branch
          %297 = sbr.rel (%p295) target = $region28
        $region27: #{tpu_custom_call.1} parent=11 // pred_region
          _
        $region28: #{tpu_custom_call.1} parent=11 // pred_fallthru
          _
        // Predicated region
        $region29: #{tpu_custom_call.1} parent=11 // pred_check
          %p298 = pneg %p209
        $region30: #{tpu_custom_call.1} parent=11 // pred_check_branch
          %300 = sbr.rel (%p298) target = $region32
        $region31: #{tpu_custom_call.1} parent=11 // pred_region
          _
        $region32: #{tpu_custom_call.1} parent=11 // pred_fallthru
          _
      $region12: #{tpu_custom_call.1} parent=5 // pred_fallthru
        _
      %p301 = scmp.lt.s32.totalorder %s26, 2
      // Predicated region
      $region33: #{tpu_custom_call.1} parent=5 // pred_check
        %p302 = pneg %p301
      $region34: #{tpu_custom_call.1} parent=5 // pred_check_branch
        %304 = sbr.rel (%p302) target = $region36
      $region35: #{tpu_custom_call.1} parent=5 // pred_region
        // Predicated region
        $region37: #{tpu_custom_call.1} parent=35 // pred_check
          %p305 = pneg %p46
        $region38: #{tpu_custom_call.1} parent=35 // pred_check_branch
          %307 = sbr.rel (%p305) target = $region40
        $region39: #{tpu_custom_call.1} parent=35 // pred_region
          %s308 = sand.u32 %s36, 1
          %s309 = scalar_lea.sflag [#allocation3], %s308
          %s310 = sand.u32 %s36, 1
          %s311 = smul.addr %s310, 8
          %s312 = scalar_lea.vmem [#allocation2], %s311
          %s314 = ssub.s32 128, 128
          %315 = vsyncadd %s309, %s314
          %s316 = smul.addr %s26, 128
          %s317 = scalar_lea.hbm %s0, %s316
          %s319 = sshll.u32 %s312, 4
          %s320 = int_to_ptr.vmem [resolvable:$true] %s319
          %322 = dma.hbm_to_vmem [thread:$0]  %s317, 128, %s320, %s309
        $region40: #{tpu_custom_call.1} parent=35 // pred_fallthru
          _
        // Predicated region
        $region41: #{tpu_custom_call.1} parent=35 // pred_check
          %p323 = pneg %p72
        $region42: #{tpu_custom_call.1} parent=35 // pred_check_branch
          %325 = sbr.rel (%p323) target = $region44
        $region43: #{tpu_custom_call.1} parent=35 // pred_region
          %p326 = scmp.lt.s32.totalorder %s26, 1
          %s327 = scalar_select %p326, %s26, 1
          %s328 = smul.addr %s327, 8
          %s329 = scalar_lea.vmem %s1, %s328
        $region44: #{tpu_custom_call.1} parent=35 // pred_fallthru
          _
        // Predicated region
        $region45: #{tpu_custom_call.1} parent=35 // pred_check
          %p330 = pneg %p98
        $region46: #{tpu_custom_call.1} parent=35 // pred_check_branch
          %332 = sbr.rel (%p330) target = $region48
        $region47: #{tpu_custom_call.1} parent=35 // pred_region
          %p333 = scmp.lt.s32.totalorder %s26, 1
          %s334 = scalar_select %p333, %s26, 1
          %s335 = smul.addr %s334, 8
          %s336 = scalar_lea.vmem %s2, %s335
        $region48: #{tpu_custom_call.1} parent=35 // pred_fallthru
          _
      $region36: #{tpu_custom_call.1} parent=5 // pred_fallthru
        _
      %p337 = scmp.le.s32.totalorder 1, %s26
      %p338 = scmp.lt.s32.totalorder %s26, 3
      %p339 = pnand %p337, %p338
      %p340 = pneg %p339
      // Predicated region
      $region49: #{tpu_custom_call.1} parent=5 // pred_check
        _
      $region50: #{tpu_custom_call.1} parent=5 // pred_check_branch
        %342 = sbr.rel (%p339) target = $region52
      $region51: #{tpu_custom_call.1} parent=5 // pred_region
        %s343 = ssub.s32 %s26, 1
        %s344 = sand.u32 %s39, 1
        %s345 = scalar_lea.sflag [#allocation3], %s344
        %s346 = sand.u32 %s39, 1
        %s347 = smul.addr %s346, 8
        %s348 = scalar_lea.vmem [#allocation2], %s347
        // Predicated region
        $region53: #{tpu_custom_call.1} parent=51 // pred_check
          %p349 = pneg %p52
        $region54: #{tpu_custom_call.1} parent=51 // pred_check_branch
          %351 = sbr.rel (%p349) target = $region56
        $region55: #{tpu_custom_call.1} parent=51 // pred_region
          %352 = dma.done %s345, 128
        $region56: #{tpu_custom_call.1} parent=51 // pred_fallthru
          _
        // Predicated region
        $region57: #{tpu_custom_call.1} parent=51 // pred_check
          %p353 = pneg %p146
        $region58: #{tpu_custom_call.1} parent=51 // pred_check_branch
          %355 = sbr.rel (%p353) target = $region60
        $region59: #{tpu_custom_call.1} parent=51 // pred_region
          %356 = dma.done [#allocation6], 256
        $region60: #{tpu_custom_call.1} parent=51 // pred_fallthru
          _
        %s357 = sand.u32 %s39, 1
        %s358 = scalar_lea.sflag [#allocation3], %s357
        %s359 = sand.u32 %s39, 1
        %s360 = smul.addr %s359, 8
        %s361 = scalar_lea.vmem [#allocation2], %s360
        %p362 = pneg %p52
        %p363 = pneg %p49
        %p364 = scmp.lt.s32.totalorder %s31, 1
        %s365 = scalar_select %p364, %s31, 1
        %s366 = smul.addr %s365, 8
        %s367 = scalar_lea.vmem %s1, %s366
        %p368 = pneg %p78
        %p369 = pneg %p75
        %p370 = scmp.lt.s32.totalorder %s31, 1
        %s371 = scalar_select %p370, %s31, 1
        %s372 = smul.addr %s371, 8
        %s373 = scalar_lea.vmem %s2, %s372
        %p374 = pneg %p104
        %p375 = pneg %p101
        %p376 = pneg %p125
        %p377 = pneg %p122
        %p378 = pneg %p146
        %p379 = pneg %p143
        %p380 = pneg %p167
        %p381 = pneg %p164
        %p382 = pneg %p188
        %p383 = pneg %p185
        %p384 = pneg %p209
        %p385 = pneg %p206
        %p386 = pneg %p235
        %p387 = pneg %p232
        %s388 = sand.u32 %s222, 1
        %s389 = scalar_lea.sflag [#allocation4], %s388
        %s390 = sand.u32 %s222, 1
        %s391 = smul.addr %s390, 8
        %s392 = scalar_lea.vmem [#allocation7], %s391
        %p393 = pneg %p261
        %p394 = pneg %p258
        %s395 = sand.u32 %s248, 1
        %s396 = scalar_lea.sflag [#allocation9], %s395
        %s397 = sand.u32 %s248, 1
        %s398 = smul.addr %s397, 8
        %s399 = scalar_lea.vmem [#allocation8], %s398
        %p400 = scmp.lt.s32.totalorder %s31, 1
        %s401 = scalar_select %p400, %s31, 1
        %s402 = smul.addr %s401, 8
        %s403 = scalar_lea.vmem %s1, %s402
        %p404 = scmp.lt.s32.totalorder %s31, 1
        %s405 = scalar_select %p404, %s31, 1
        %s406 = smul.addr %s405, 8
        %s407 = scalar_lea.vmem %s2, %s406
        %v408 = vld [vmem:[%s348] sm:$0xff]
        %v409 = vld [vmem:[%s403] sm:$0xff]
        %v410 = vld [vmem:[%s3] sm:$0xff]
        %v411 = vld [vmem:[%s3 + $0x8] sm:$0xff]
        %v412 = vld [vmem:[%s3 + $0x10] sm:$0xff]
        %v413 = vld [vmem:[%s3 + $0x18] sm:$0xff]
        %v414 = vld [vmem:[%s3 + $0x20] sm:$0xff]
        %v415 = vld [vmem:[%s3 + $0x28] sm:$0xff]
        %v416 = vld [vmem:[%s3 + $0x30] sm:$0xff]
        %v417 = vld [vmem:[%s3 + $0x38] sm:$0xff]
        %v418 = vld [vmem:[#allocation5] sm:$0xff]
        %v419 = vld [vmem:[#allocation5 + $0x8] sm:$0x3]
        %vm420 = vcmask 80896
        %v422 = vsel %vm420, %v409, 0
        %vm424 = vcmask 1041408
        %v426 = vsel %vm424, %v419, 0
        %428 = vmatprep.subr.mxu0 0.0
        %429 = vmatpush1.msra.mxu0 %v418
        %430 = vmatprep.subr.mxu0 0.0
        %431 = vmatpush1.msra.mxu0 %v426
        %432 = vmatprep.subr.mxu0 0.0
        %433 = vmatpush1.msra.mxu0 0.0
        %434 = vmatprep.subr.mxu0 0.0
        %435 = vmatpush1.msra.mxu0 0.0
        %436 = vmatprep.subr.mxu0 0.0
        %437 = vmatpush1.msra.mxu0 0.0
        %438 = vmatprep.subr.mxu0 0.0
        %439 = vmatpush1.msra.mxu0 0.0
        %440 = vmatprep.subr.mxu0 0.0
        %441 = vmatpush1.msra.mxu0 0.0
        %442 = vmatprep.subr.mxu0 0.0
        %443 = vmatpush1.msra.mxu0 0.0
        %444 = vmatprep.subr.mxu0 0.0
        %445 = vmatpush1.msra.mxu0 0.0
        %446 = vmatprep.subr.mxu0 0.0
        %447 = vmatpush1.msra.mxu0 0.0
        %448 = vmatprep.subr.mxu0 0.0
        %449 = vmatpush1.msra.mxu0 0.0
        %450 = vmatprep.subr.mxu0 0.0
        %451 = vmatpush1.msra.mxu0 0.0
        %452 = vmatprep.subr.mxu0 0.0
        %453 = vmatpush1.msra.mxu0 0.0
        %454 = vmatprep.subr.mxu0 0.0
        %455 = vmatpush1.msra.mxu0 0.0
        %456 = vmatprep.subr.mxu0 0.0
        %457 = vmatpush1.msra.mxu0 0.0
        %458 = vmatprep.subr.mxu0 0.0
        %459 = vmatpush1.msra.mxu0 0.0
        %460 = vmatprep.subr.mxu0 0.0
        %461 = vmatpush1.msra.mxu0 0.0
        %462 = vmatprep.subr.mxu0 0.0
        %463 = vmatpush1.msra.mxu0 0.0
        %464 = vmatprep.subr.mxu0 0.0
        %465 = vmatpush1.msra.mxu0 0.0
        %466 = vmatprep.subr.mxu0 0.0
        %467 = vmatpush1.msra.mxu0 0.0
        %468 = vmatprep.subr.mxu0 0.0
        %469 = vmatpush1.msra.mxu0 0.0
        %470 = vmatprep.subr.mxu0 0.0
        %471 = vmatpush1.msra.mxu0 0.0
        %472 = vmatprep.subr.mxu0 0.0
        %473 = vmatpush1.msra.mxu0 0.0
        %474 = vmatprep.subr.mxu0 0.0
        %475 = vmatpush1.msra.mxu0 0.0
        %476 = vmatprep.subr.mxu0 0.0
        %477 = vmatpush1.msra.mxu0 0.0
        %478 = vmatprep.subr.mxu0 0.0
        %479 = vmatpush1.msra.mxu0 0.0
        %480 = vmatprep.subr.mxu0 0.0
        %481 = vmatpush1.msra.mxu0 0.0
        %482 = vmatprep.subr.mxu0 0.0
        %483 = vmatpush1.msra.mxu0 0.0
        %484 = vmatprep.subr.mxu0 0.0
        %485 = vmatpush1.msra.mxu0 0.0
        %486 = vmatprep.subr.mxu0 0.0
        %487 = vmatpush1.msra.mxu0 0.0
        %488 = vmatprep.subr.mxu0 0.0
        %489 = vmatpush1.msra.mxu0 0.0
        %490 = vmatprep.subr.mxu0 0.0
        %491 = vmatpush1.msra.mxu0 0.0
        %492 = vmatprep.mubr.f32.mxu0 0.0
        %493 = vmatmul.mubr.f32.gmra.mrb[0].mxu0 %v422
        %v494 = vpop.f32.mrb[0].mxu0
        %v495 = vadd.f32 0.0, %v494
        %v496 = vpop.f32.mrb[0].mxu0
        %497 = vdwg.mxu0
        %vm498 = vcmask 523264
        %v500 = vsel %vm498, %v408, 0
        %502 = vmatprep.subr.mxu0 0.0
        %503 = vmatpush1.msra.mxu0 %v410
        %504 = vmatprep.subr.mxu0 0.0
        %505 = vmatpush1.msra.mxu0 %v411
        %506 = vmatprep.subr.mxu0 0.0
        %507 = vmatpush1.msra.mxu0 %v412
        %508 = vmatprep.subr.mxu0 0.0
        %509 = vmatpush1.msra.mxu0 %v413
        %510 = vmatprep.subr.mxu0 0.0
        %511 = vmatpush1.msra.mxu0 %v414
        %512 = vmatprep.subr.mxu0 0.0
        %513 = vmatpush1.msra.mxu0 %v415
        %514 = vmatprep.subr.mxu0 0.0
        %515 = vmatpush1.msra.mxu0 %v416
        %516 = vmatprep.subr.mxu0 0.0
        %517 = vmatpush1.msra.mxu0 %v417
        %518 = vmatprep.subr.mxu0 0.0
        %519 = vmatpush1.msra.mxu0 0.0
        %520 = vmatprep.subr.mxu0 0.0
        %521 = vmatpush1.msra.mxu0 0.0
        %522 = vmatprep.subr.mxu0 0.0
        %523 = vmatpush1.msra.mxu0 0.0
        %524 = vmatprep.subr.mxu0 0.0
        %525 = vmatpush1.msra.mxu0 0.0
        %526 = vmatprep.subr.mxu0 0.0
        %527 = vmatpush1.msra.mxu0 0.0
        %528 = vmatprep.subr.mxu0 0.0
        %529 = vmatpush1.msra.mxu0 0.0
        %530 = vmatprep.subr.mxu0 0.0
        %531 = vmatpush1.msra.mxu0 0.0
        %532 = vmatprep.subr.mxu0 0.0
        %533 = vmatpush1.msra.mxu0 0.0
        %534 = vmatprep.subr.mxu0 0.0
        %535 = vmatpush1.msra.mxu0 0.0
        %536 = vmatprep.subr.mxu0 0.0
        %537 = vmatpush1.msra.mxu0 0.0
        %538 = vmatprep.subr.mxu0 0.0
        %539 = vmatpush1.msra.mxu0 0.0
        %540 = vmatprep.subr.mxu0 0.0
        %541 = vmatpush1.msra.mxu0 0.0
        %542 = vmatprep.subr.mxu0 0.0
        %543 = vmatpush1.msra.mxu0 0.0
        %544 = vmatprep.subr.mxu0 0.0
        %545 = vmatpush1.msra.mxu0 0.0
        %546 = vmatprep.subr.mxu0 0.0
        %547 = vmatpush1.msra.mxu0 0.0
        %548 = vmatprep.subr.mxu0 0.0
        %549 = vmatpush1.msra.mxu0 0.0
        %550 = vmatprep.subr.mxu0 0.0
        %551 = vmatpush1.msra.mxu0 0.0
        %552 = vmatprep.subr.mxu0 0.0
        %553 = vmatpush1.msra.mxu0 0.0
        %554 = vmatprep.subr.mxu0 0.0
        %555 = vmatpush1.msra.mxu0 0.0
        %556 = vmatprep.subr.mxu0 0.0
        %557 = vmatpush1.msra.mxu0 0.0
        %558 = vmatprep.subr.mxu0 0.0
        %559 = vmatpush1.msra.mxu0 0.0
        %560 = vmatprep.subr.mxu0 0.0
        %561 = vmatpush1.msra.mxu0 0.0
        %562 = vmatprep.subr.mxu0 0.0
        %563 = vmatpush1.msra.mxu0 0.0
        %564 = vmatprep.subr.mxu0 0.0
        %565 = vmatpush1.msra.mxu0 0.0
        %566 = vmatprep.mubr.f32.mxu0 0.0
        %567 = vmatmul.mubr.f32.gmra.mrb[0].mxu0 %v500
        %v568 = vpop.f32.mrb[0].mxu0
        %v569 = vadd.f32 %v495, %v568
        %v570 = vpop.f32.mrb[0].mxu0
        %571 = vdwg.mxu0
        %v572 = vld [vmem:[%s5] sm:$0x1]
        %v574 = vlaneseq
        %v575 = vshrl.u32 %v574, 7
        %v576 = vsub.s32 0, %v575
        %v577 = vrot.slane %v572, %v576
        %v579 = vadd.f32 %v569, %v577
        %v580 = vld [vmem:[%s6] sm:$0xff]
        %v581 = vld [vmem:[%s6 + $0x8] sm:$0xff]
        %v582 = vld [vmem:[%s6 + $0x10] sm:$0xff]
        %v583 = vld [vmem:[%s6 + $0x18] sm:$0xff]
        %v584 = vld [vmem:[%s6 + $0x20] sm:$0xff]
        %v585 = vld [vmem:[%s6 + $0x28] sm:$0xff]
        %v586 = vld [vmem:[%s6 + $0x30] sm:$0xff]
        %v587 = vld [vmem:[%s6 + $0x38] sm:$0xff]
        %v588 = vld [vmem:[%s7] sm:$0x3]
        %v590 = vlaneseq
        %v591 = vshrl.u32 %v590, 7
        %v592 = vsub.s32 0, %v591
        %v593 = vrot.slane %v588, %v592
        %v594 = vlaneseq
        %v595 = vshrl.u32 %v594, 7
        %v596 = vsub.s32 1, %v595
        %v597 = vrot.slane %v588, %v596
        %vm600 = vcmask 261120
        %v602 = vsel %vm600, %v579, 0
        %604 = vmatprep.subr.mxu0 %v581
        %605 = vmatpush1.msra.mxu0 %v580
        %606 = vmatprep.subr.mxu0 %v583
        %607 = vmatpush1.msra.mxu0 %v582
        %608 = vmatprep.subr.mxu0 %v585
        %609 = vmatpush1.msra.mxu0 %v584
        %610 = vmatprep.subr.mxu0 %v587
        %611 = vmatpush1.msra.mxu0 %v586
        %612 = vmatprep.subr.mxu0 0.0
        %613 = vmatpush1.msra.mxu0 0.0
        %614 = vmatprep.subr.mxu0 0.0
        %615 = vmatpush1.msra.mxu0 0.0
        %616 = vmatprep.subr.mxu0 0.0
        %617 = vmatpush1.msra.mxu0 0.0
        %618 = vmatprep.subr.mxu0 0.0
        %619 = vmatpush1.msra.mxu0 0.0
        %620 = vmatprep.subr.mxu0 0.0
        %621 = vmatpush1.msra.mxu0 0.0
        %622 = vmatprep.subr.mxu0 0.0
        %623 = vmatpush1.msra.mxu0 0.0
        %624 = vmatprep.subr.mxu0 0.0
        %625 = vmatpush1.msra.mxu0 0.0
        %626 = vmatprep.subr.mxu0 0.0
        %627 = vmatpush1.msra.mxu0 0.0
        %628 = vmatprep.subr.mxu0 0.0
        %629 = vmatpush1.msra.mxu0 0.0
        %630 = vmatprep.subr.mxu0 0.0
        %631 = vmatpush1.msra.mxu0 0.0
        %632 = vmatprep.subr.mxu0 0.0
        %633 = vmatpush1.msra.mxu0 0.0
        %634 = vmatprep.subr.mxu0 0.0
        %635 = vmatpush1.msra.mxu0 0.0
        %636 = vmatprep.subr.mxu0 0.0
        %637 = vmatpush1.msra.mxu0 0.0
        %638 = vmatprep.subr.mxu0 0.0
        %639 = vmatpush1.msra.mxu0 0.0
        %640 = vmatprep.subr.mxu0 0.0
        %641 = vmatpush1.msra.mxu0 0.0
        %642 = vmatprep.subr.mxu0 0.0
        %643 = vmatpush1.msra.mxu0 0.0
        %644 = vmatprep.subr.mxu0 0.0
        %645 = vmatpush1.msra.mxu0 0.0
        %646 = vmatprep.subr.mxu0 0.0
        %647 = vmatpush1.msra.mxu0 0.0
        %648 = vmatprep.subr.mxu0 0.0
        %649 = vmatpush1.msra.mxu0 0.0
        %650 = vmatprep.subr.mxu0 0.0
        %651 = vmatpush1.msra.mxu0 0.0
        %652 = vmatprep.subr.mxu0 0.0
        %653 = vmatpush1.msra.mxu0 0.0
        %654 = vmatprep.subr.mxu0 0.0
        %655 = vmatpush1.msra.mxu0 0.0
        %656 = vmatprep.subr.mxu0 0.0
        %657 = vmatpush1.msra.mxu0 0.0
        %658 = vmatprep.subr.mxu0 0.0
        %659 = vmatpush1.msra.mxu0 0.0
        %660 = vmatprep.subr.mxu0 0.0
        %661 = vmatpush1.msra.mxu0 0.0
        %662 = vmatprep.subr.mxu0 0.0
        %663 = vmatpush1.msra.mxu0 0.0
        %664 = vmatprep.subr.mxu0 0.0
        %665 = vmatpush1.msra.mxu0 0.0
        %666 = vmatprep.subr.mxu0 0.0
        %667 = vmatpush1.msra.mxu0 0.0
        %668 = vmatprep.mubr.f32.mxu0 0.0
        %669 = vmatmul.mubr.f32.gmra.mrb[0].mxu0 %v602
        %v670 = vpop.f32.mrb[0].mxu0
        %v671 = vadd.f32 %v593, %v670
        %v672 = vpop.f32.mrb[0].mxu0
        %v673 = vadd.f32 %v597, %v672
        %674 = vdwg.mxu0
        %v675 = vmul.f32 %v673, 0.5
        %v676 = vmul.f32 %v675, 1.442695
        %v677 = vpow.pop %v676
        %v678 = vld [vmem:[%s407] sm:$0xff]
        %v679 = vmul.f32 %v677, %v678
        %v680 = vadd.f32 %v671, %v679
        %681 = vst [vmem:[%s399] sm:$0xff] %v680
        %v682 = vsel %vm498, %v408, -inf
        %683 = vmax.xlane.f32.xlu0 %v682
        %v684 = vpop.xlane.xlu0 %683
        %v685 = vsub.f32 %v408, %v684
        %v686 = vmul.f32 %v685, 1.442695
        %v687 = vpow.pop %v686
        %v688 = vsel %vm498, %v687, 0.0
        %689 = vadd.xlane.f32.xlu0 %v688
        %v690 = vpop.xlane.xlu0 %689
        %v691 = vlog2.pop %v690
        %v692 = vmul.f32 %v691, 0.6931472
        %v693 = vadd.f32 %v684, %v692
        %v694 = vsub.f32 %v408, %v693
        %695 = vst.msk [vmem:[%s392] sm:$0xff] %vm498, %v694
        %s696 = sand.u32 %s222, 1
        %s697 = scalar_lea.sflag [#allocation4], %s696
        %s698 = sand.u32 %s222, 1
        %s699 = smul.addr %s698, 8
        %s700 = scalar_lea.vmem [#allocation7], %s699
        %s701 = sand.u32 %s248, 1
        %s702 = scalar_lea.sflag [#allocation9], %s701
        %s703 = sand.u32 %s248, 1
        %s704 = smul.addr %s703, 8
        %s705 = scalar_lea.vmem [#allocation8], %s704
        // Predicated region
        $region61: #{tpu_custom_call.1} parent=51 // pred_check
          %p706 = pneg %p232
        $region62: #{tpu_custom_call.1} parent=51 // pred_check_branch
          %708 = sbr.rel (%p706) target = $region64
        $region63: #{tpu_custom_call.1} parent=51 // pred_region
          %s710 = ssub.s32 128, 128
          %711 = vsyncadd %s697, %s710
          %s712 = smul.addr %s31, 128
          %s713 = scalar_lea.hbm %s8, %s712
          %s715 = sshll.u32 %s700, 4
          %s716 = int_to_ptr.vmem [resolvable:$true] %s715
          %718 = dma.vmem_to_hbm [thread:$0]  %s716, 128, %s713, %s697
        $region64: #{tpu_custom_call.1} parent=51 // pred_fallthru
          _
        // Predicated region
        $region65: #{tpu_custom_call.1} parent=51 // pred_check
          %p719 = pneg %p258
        $region66: #{tpu_custom_call.1} parent=51 // pred_check_branch
          %721 = sbr.rel (%p719) target = $region68
        $region67: #{tpu_custom_call.1} parent=51 // pred_region
          %s723 = ssub.s32 128, 128
          %724 = vsyncadd %s702, %s723
          %s725 = smul.addr %s31, 128
          %s726 = scalar_lea.hbm %s9, %s725
          %s728 = sshll.u32 %s705, 4
          %s729 = int_to_ptr.vmem [resolvable:$true] %s728
          %731 = dma.vmem_to_hbm [thread:$0]  %s729, 128, %s726, %s702
        $region68: #{tpu_custom_call.1} parent=51 // pred_fallthru
          _
      $region52: #{tpu_custom_call.1} parent=5 // pred_fallthru
        _
      %p732 = scmp.le.s32.totalorder 2, %s26
      // Predicated region
      $region69: #{tpu_custom_call.1} parent=5 // pred_check
        %p733 = pneg %p732
      $region70: #{tpu_custom_call.1} parent=5 // pred_check_branch
        %735 = sbr.rel (%p733) target = $region72
      $region71: #{tpu_custom_call.1} parent=5 // pred_region
        %s736 = ssub.s32 %s26, 2
        // Predicated region
        $region73: #{tpu_custom_call.1} parent=71 // pred_check
          %p737 = pneg %p238
        $region74: #{tpu_custom_call.1} parent=71 // pred_check_branch
          %739 = sbr.rel (%p737) target = $region76
        $region75: #{tpu_custom_call.1} parent=71 // pred_region
          %s740 = sand.u32 %s223, 1
          %s741 = scalar_lea.sflag [#allocation4], %s740
          %s742 = sand.u32 %s223, 1
          %s743 = smul.addr %s742, 8
          %s744 = scalar_lea.vmem [#allocation7], %s743
          %745 = dma.done %s741, 128
        $region76: #{tpu_custom_call.1} parent=71 // pred_fallthru
          _
        // Predicated region
        $region77: #{tpu_custom_call.1} parent=71 // pred_check
          %p746 = pneg %p264
        $region78: #{tpu_custom_call.1} parent=71 // pred_check_branch
          %748 = sbr.rel (%p746) target = $region80
        $region79: #{tpu_custom_call.1} parent=71 // pred_region
          %s749 = sand.u32 %s249, 1
          %s750 = scalar_lea.sflag [#allocation9], %s749
          %s751 = sand.u32 %s249, 1
          %s752 = smul.addr %s751, 8
          %s753 = scalar_lea.vmem [#allocation8], %s752
          %754 = dma.done %s750, 128
        $region80: #{tpu_custom_call.1} parent=71 // pred_fallthru
          _
      $region72: #{tpu_custom_call.1} parent=5 // pred_fallthru
        _
    $region6: #{tpu_custom_call.1} parent=1 // loop_footer
      %s30 = sadd.s32 1, %s26
    $region7: #{tpu_custom_call.1} parent=1 // loop_footer_branch
      %25 = sbr.rel target = $region3
    $region8: #{tpu_custom_call.1} parent=1 // loop_exit
      _
    %755 = vsyncpa [#allocation3], 1
    %s756 = scalar_lea.sflag [#allocation3], 1
    %757 = vsyncpa %s756, 1
    %758 = vsyncpa [#allocation6], 1
    %759 = vsyncpa [#allocation4], 1
    %s760 = scalar_lea.sflag [#allocation4], 1
    %761 = vsyncpa %s760, 1
    %762 = vsyncpa [#allocation9], 1
    %s763 = scalar_lea.sflag [#allocation9], 1
    %764 = vsyncpa %s763, 1

</llo_original>
